<compile_context>
chip_gen: v6e
topology: v6e:2x2x1
jax: 0.10.0
libtpu: 0.0.40
codegen_flags: <defaults>
</compile_context>

<pallas_src>
import functools

import jax
import jax.numpy as jnp
from jax import lax
from jax.experimental import pallas as pl
from jax.experimental.pallas import tpu as pltpu

MATMUL_DTYPE = jnp.bfloat16  # MXU operand dtype (f32 accumulation everywhere)


def _lstm_recurrence_kernel(gx_ref, whh_ref, out_ref, hn_ref, cn_ref,
                            h_sc, c_sc):
    """Recurrent part of one LSTM layer for one time chunk.

    gx_ref  : (T, B, 4H) f32   precomputed x@W_ih + (b_ih + b_hh) for this chunk
    whh_ref : (H, 4H)    bf16  resident hidden->gates weights (gate order i,f,g,o)
    out_ref : (T, B, H)  f32   per-step hidden outputs for this chunk
    hn_ref  : (B, H)     f32   final hidden (constant-index block, written each chunk)
    cn_ref  : (B, H)     f32   final cell
    h_sc/c_sc : (B, H) f32 VMEM scratch carrying the recurrent state across chunks.
    """
    @pl.when(pl.program_id(0) == 0)
    def _init():
        h_sc[...] = jnp.zeros_like(h_sc)
        c_sc[...] = jnp.zeros_like(c_sc)

    H = h_sc.shape[-1]
    T = gx_ref.shape[0]
    whh = whh_ref[...]  # hoisted: stays in vregs/VMEM across the inner loop

    def step(t, carry):
        h = h_sc[...]
        c = c_sc[...]
        # Only the sequential part runs per step: one small matmul on the MXU.
        gates = gx_ref[t] + jnp.dot(h.astype(whh.dtype), whh,
                                    preferred_element_type=jnp.float32)
        i_g = jax.nn.sigmoid(gates[:, 0 * H:1 * H])
        f_g = jax.nn.sigmoid(gates[:, 1 * H:2 * H])
        g_g = jnp.tanh(gates[:, 2 * H:3 * H])
        o_g = jax.nn.sigmoid(gates[:, 3 * H:4 * H])

        c_new = f_g * c + i_g * g_g
        h_new = o_g * jnp.tanh(c_new)

        h_sc[...] = h_new
        c_sc[...] = c_new
        out_ref[t] = h_new
        return carry

    lax.fori_loop(0, T, step, 0, unroll=True)

    # Constant-index output blocks: written every chunk, DMA'd back once at the
    # end of the grid -> robust to any future grid restructuring.
    hn_ref[...] = h_sc[...]
    cn_ref[...] = c_sc[...]


def _pick_time_chunk(seq_len, target=16):
    """Largest divisor of seq_len that is <= target."""
    for c in range(min(seq_len, target), 0, -1):
        if seq_len % c == 0:
            return c
    return 1


def lstm_layer(x, w_ih, w_hh, bias):
    """One LSTM layer over the full sequence.

    x: (S, B, E) f32; w_ih: (E, 4H); w_hh: (H, 4H); bias: (4H,) = b_ih + b_hh.
    Returns (output (S,B,H) f32, h_n (B,H) f32, c_n (B,H) f32).
    """
    S, B, E = x.shape
    H = w_hh.shape[0]

    # --- Hoisted input projection: one big GEMM over all timesteps (no
    # sequential dependency), bf16 operands, f32 accumulate. ---
    gates_x = jnp.einsum(
        "sbe,eg->sbg",
        x.astype(MATMUL_DTYPE), w_ih.astype(MATMUL_DTYPE),
        preferred_element_type=jnp.float32,
    ) + bias.astype(jnp.float32)                      # (S, B, 4H) f32

    # Pad batch to a multiple of 8 sublanes (padded rows stay exactly zero).
    b_pad = ((B + 7) // 8) * 8
    if b_pad != B:
        gates_x = jnp.pad(gates_x, ((0, 0), (0, b_pad - B), (0, 0)))

    t_chunk = _pick_time_chunk(S)
    n_chunks = S // t_chunk

    out_shapes = (
        jax.ShapeDtypeStruct((S, b_pad, H), jnp.float32),   # per-step outputs
        jax.ShapeDtypeStruct((b_pad, H), jnp.float32),      # final h
        jax.ShapeDtypeStruct((b_pad, H), jnp.float32),      # final c
    )

    grid_spec = pltpu.PrefetchScalarGridSpec(
        num_scalar_prefetch=0,
        grid=(n_chunks,),
        in_specs=[
            pl.BlockSpec((t_chunk, b_pad, 4 * H), lambda i: (i, 0, 0)),  # gates_x chunk
            pl.BlockSpec((H, 4 * H), lambda i: (0, 0)),                  # W_hh (resident)
        ],
        out_specs=[
            pl.BlockSpec((t_chunk, b_pad, H), lambda i: (i, 0, 0)),      # output chunk
            pl.BlockSpec((b_pad, H), lambda i: (0, 0)),                  # h_n
            pl.BlockSpec((b_pad, H), lambda i: (0, 0)),                  # c_n
        ],
        scratch_shapes=[
            pltpu.VMEM((b_pad, H), jnp.float32),   # h state
            pltpu.VMEM((b_pad, H), jnp.float32),   # c state
        ],
    )

    out, h_n, c_n = pl.pallas_call(
        _lstm_recurrence_kernel,
        out_shape=out_shapes,
        grid_spec=grid_spec,
        compiler_params=pltpu.CompilerParams(
            dimension_semantics=("arbitrary",)),   # sequential recurrence
    )(gates_x, w_hh.astype(MATMUL_DTYPE))

    return out[:, :B, :], h_n[:B], c_n[:B]


def init_encoder_params(key, input_dim, emb_dim, hid_dim, n_layers):
    """Parameter init mimicking PyTorch defaults (weights stored transposed)."""
    keys = jax.random.split(key, 1 + 4 * n_layers)
    params = {"embedding": jax.random.normal(
        keys[0], (input_dim, emb_dim), dtype=jnp.float32)}
    bound = 1.0 / jnp.sqrt(hid_dim)
    layers = []
    for layer in range(n_layers):
        in_sz = emb_dim if layer == 0 else hid_dim
        k_wih, k_whh, k_bih, k_bhh = keys[1 + 4 * layer: 1 + 4 * (layer + 1)]
        w_ih = jax.random.uniform(k_wih, (in_sz, 4 * hid_dim),
                                  minval=-bound, maxval=bound, dtype=jnp.float32)
        w_hh = jax.random.uniform(k_whh, (hid_dim, 4 * hid_dim),
                                  minval=-bound, maxval=bound, dtype=jnp.float32)
        b_ih = jax.random.uniform(k_bih, (4 * hid_dim,),
                                  minval=-bound, maxval=bound, dtype=jnp.float32)
        b_hh = jax.random.uniform(k_bhh, (4 * hid_dim,),
                                  minval=-bound, maxval=bound, dtype=jnp.float32)
        layers.append({"w_ih": w_ih, "w_hh": w_hh, "b": b_ih + b_hh})
    params["lstm"] = layers
    return params


@jax.jit
def encoder_forward(params, src):
    """src: (seq_len, batch) int32 -> (output, hidden, cell)."""
    embedded = jnp.take(params["embedding"], src, axis=0)   # (S, B, E); glue
    # Dropout(p=0.0) == identity.
    x = embedded
    h_list, c_list = [], []
    for lp in params["lstm"]:
        x, h_n, c_n = lstm_layer(x, lp["w_ih"], lp["w_hh"], lp["b"])
        h_list.append(h_n)
        c_list.append(c_n)
        # (inter-layer LSTM dropout would apply here; p=0.0 -> identity)
    return x, jnp.stack(h_list, axis=0), jnp.stack(c_list, axis=0)


# ---------------- pure-JAX reference (f32) for a correctness check ----------
def _lstm_layer_ref(x, w_ih, w_hh, bias):
    H = w_hh.shape[0]

    def step(carry, x_t):
        h, c = carry
        gates = x_t @ w_ih + h @ w_hh + bias
        i = jax.nn.sigmoid(gates[:, 0 * H:1 * H])
        f = jax.nn.sigmoid(gates[:, 1 * H:2 * H])
        g = jnp.tanh(gates[:, 2 * H:3 * H])
        o = jax.nn.sigmoid(gates[:, 3 * H:4 * H])
        c = f * c + i * g
        h = o * jnp.tanh(c)
        return (h, c), h

    B = x.shape[1]
    init = (jnp.zeros((B, H), jnp.float32), jnp.zeros((B, H), jnp.float32))
    (h, c), out = lax.scan(step, init, x)
    return out, h, c


def encoder_forward_ref(params, src):
    x = jnp.take(params["embedding"], src, axis=0)
    h_list, c_list = [], []
    for lp in params["lstm"]:
        x, h_n, c_n = _lstm_layer_ref(x, lp["w_ih"], lp["w_hh"], lp["b"])
        h_list.append(h_n)
        c_list.append(c_n)
    return x, jnp.stack(h_list, axis=0), jnp.stack(c_list, axis=0)


if __name__ == "__main__":
    input_dim = 16     # vocab size
    emb_dim = 32
    hid_dim = 32
    n_layers = 2
    seq_len = 8
    batch = 2

    key = jax.random.PRNGKey(0)
    k_param, k_src = jax.random.split(key)

    params = init_encoder_params(k_param, input_dim, emb_dim, hid_dim, n_layers)
    src = jax.random.randint(k_src, (seq_len, batch), 0, input_dim,
                             dtype=jnp.int32)

    output, hidden, cell = encoder_forward(params, src)
    jax.block_until_ready((output, hidden, cell))

    assert output.shape == (seq_len, batch, hid_dim)
    assert hidden.shape == (n_layers, batch, hid_dim)
    assert cell.shape == (n_layers, batch, hid_dim)

    # Numerical check against an f32 pure-JAX reference (kernel uses bf16
    # MXU operands with f32 accumulation -> loose tolerance).
    o_ref, h_ref, c_ref = encoder_forward_ref(params, src)
    assert jnp.max(jnp.abs(output - o_ref)) < 5e-2
    assert jnp.max(jnp.abs(hidden - h_ref)) < 5e-2
    assert jnp.max(jnp.abs(cell - c_ref)) < 5e-2

    print("KERNEL_OK")
</pallas_src>

<mosaic_0001>
module attributes {stable_mosaic.version = 11 : i64} {
  func.func @_lstm_recurrence_kernel(%arg0: i32, %arg1: memref<8x8x128xf32, #tpu.memory_space<vmem>>, %arg2: memref<32x128xbf16, #tpu.memory_space<vmem>>, %arg3: memref<8x8x32xf32, #tpu.memory_space<vmem>>, %arg4: memref<8x32xf32, #tpu.memory_space<vmem>>, %arg5: memref<8x32xf32, #tpu.memory_space<vmem>>, %arg6: memref<8x32xf32, #tpu.memory_space<vmem>>, %arg7: memref<8x32xf32, #tpu.memory_space<vmem>>) attributes {dimension_semantics = [#tpu.dimension_semantics<arbitrary>], iteration_bounds = array<i64: 1>, scalar_prefetch = 0 : i64, scratch_operands = 2 : i64, tpu.core_type = #tpu.core_type<tc>, window_params = [{transform_indices = @transform_0, window_bounds = array<i64: 8, 8, 128>}, {pipeline_mode = #tpu.pipeline_mode<synchronous>, transform_indices = @transform_1, window_bounds = array<i64: 32, 128>}, {transform_indices = @transform_2, window_bounds = array<i64: 8, 8, 32>}, {pipeline_mode = #tpu.pipeline_mode<synchronous>, transform_indices = @transform_3, window_bounds = array<i64: 8, 32>}, {pipeline_mode = #tpu.pipeline_mode<synchronous>, transform_indices = @transform_4, window_bounds = array<i64: 8, 32>}]} {
    %c0_i32 = arith.constant 0 : i32
    %0 = arith.cmpi eq, %arg0, %c0_i32 : i32
    %1 = arith.extui %0 : i1 to i32
    %c0_i32_0 = arith.constant 0 : i32
    %2 = arith.cmpi ne, %1, %c0_i32_0 : i32
    scf.if %2 {
      %cst_138 = arith.constant 0.000000e+00 : f32
      %320 = vector.broadcast %cst_138 : f32 to vector<8x32xf32>
      %c0_139 = arith.constant 0 : index
      %c0_140 = arith.constant 0 : index
      %321 = vector.load %arg6[%c0_139, %c0_140] : memref<8x32xf32, #tpu.memory_space<vmem>>, vector<8x32xf32>
      tpu.vector_store %arg6[%c0_139, %c0_140], %320 {strides = array<i32>} : memref<8x32xf32, #tpu.memory_space<vmem>>, vector<8x32xf32>,
      %cst_141 = arith.constant 0.000000e+00 : f32
      %322 = vector.broadcast %cst_141 : f32 to vector<8x32xf32>
      %c0_142 = arith.constant 0 : index
      %c0_143 = arith.constant 0 : index
      %323 = vector.load %arg7[%c0_142, %c0_143] : memref<8x32xf32, #tpu.memory_space<vmem>>, vector<8x32xf32>
      tpu.vector_store %arg7[%c0_142, %c0_143], %322 {strides = array<i32>} : memref<8x32xf32, #tpu.memory_space<vmem>>, vector<8x32xf32>,
    } else {
    }
    %c0 = arith.constant 0 : index
    %c0_1 = arith.constant 0 : index
    %3 = vector.load %arg2[%c0, %c0_1] : memref<32x128xbf16, #tpu.memory_space<vmem>>, vector<32x128xbf16>
    %c0_i32_2 = arith.constant 0 : i32
    %c0_3 = arith.constant 0 : index
    %c0_4 = arith.constant 0 : index
    %4 = vector.load %arg6[%c0_3, %c0_4] : memref<8x32xf32, #tpu.memory_space<vmem>>, vector<8x32xf32>
    %c0_5 = arith.constant 0 : index
    %c0_6 = arith.constant 0 : index
    %5 = vector.load %arg7[%c0_5, %c0_6] : memref<8x32xf32, #tpu.memory_space<vmem>>, vector<8x32xf32>
    %6 = arith.index_cast %c0_i32_2 : i32 to index
    %c0_7 = arith.constant 0 : index
    %c0_8 = arith.constant 0 : index
    %7 = vector.load %arg1[%6, %c0_7, %c0_8] : memref<8x8x128xf32, #tpu.memory_space<vmem>>, vector<1x8x128xf32>
    %8 = vector.shape_cast %7 : vector<1x8x128xf32> to vector<8x128xf32>
    %9 = arith.truncf %4 : vector<8x32xf32> to vector<8x32xbf16>
    %cst = arith.constant dense<0.000000e+00> : vector<8x128xf32>
    %10 = tpu.matmul %9, %3, %cst {dimension_numbers = #tpu.dot_dimension_numbers<[1], [0], [0], [1], [0, 0, 1, 1], [], []>} : vector<8x32xbf16>, vector<32x128xbf16>, vector<8x128xf32> -> vector<8x128xf32>
    %11 = arith.addf %8, %10 : vector<8x128xf32>
    %12 = vector.extract_strided_slice %11 {offsets = [0, 0], sizes = [8, 32], strides = [1, 1]} : vector<8x128xf32> to vector<8x32xf32>
    %13 = arith.negf %12 : vector<8x32xf32>
    %14 = math.exp %13 : vector<8x32xf32>
    %cst_9 = arith.constant 1.000000e+00 : f32
    %15 = vector.broadcast %cst_9 : f32 to vector<8x32xf32>
    %16 = arith.addf %15, %14 : vector<8x32xf32>
    %17 = arith.divf %15, %16 : vector<8x32xf32>
    %18 = vector.extract_strided_slice %11 {offsets = [0, 32], sizes = [8, 32], strides = [1, 1]} : vector<8x128xf32> to vector<8x32xf32>
    %19 = arith.negf %18 : vector<8x32xf32>
    %20 = math.exp %19 : vector<8x32xf32>
    %cst_10 = arith.constant 1.000000e+00 : f32
    %21 = vector.broadcast %cst_10 : f32 to vector<8x32xf32>
    %22 = arith.addf %21, %20 : vector<8x32xf32>
    %23 = arith.divf %21, %22 : vector<8x32xf32>
    %24 = vector.extract_strided_slice %11 {offsets = [0, 64], sizes = [8, 32], strides = [1, 1]} : vector<8x128xf32> to vector<8x32xf32>
    %25 = math.tanh %24 : vector<8x32xf32>
    %26 = vector.extract_strided_slice %11 {offsets = [0, 96], sizes = [8, 32], strides = [1, 1]} : vector<8x128xf32> to vector<8x32xf32>
    %27 = arith.negf %26 : vector<8x32xf32>
    %28 = math.exp %27 : vector<8x32xf32>
    %cst_11 = arith.constant 1.000000e+00 : f32
    %29 = vector.broadcast %cst_11 : f32 to vector<8x32xf32>
    %30 = arith.addf %29, %28 : vector<8x32xf32>
    %31 = arith.divf %29, %30 : vector<8x32xf32>
    %32 = arith.mulf %23, %5 : vector<8x32xf32>
    %33 = arith.mulf %17, %25 : vector<8x32xf32>
    %34 = arith.addf %32, %33 : vector<8x32xf32>
    %35 = math.tanh %34 : vector<8x32xf32>
    %36 = arith.mulf %31, %35 : vector<8x32xf32>
    %c0_12 = arith.constant 0 : index
    %c0_13 = arith.constant 0 : index
    %37 = vector.load %arg6[%c0_12, %c0_13] : memref<8x32xf32, #tpu.memory_space<vmem>>, vector<8x32xf32>
    tpu.vector_store %arg6[%c0_12, %c0_13], %36 {strides = array<i32>} : memref<8x32xf32, #tpu.memory_space<vmem>>, vector<8x32xf32>,
    %c0_14 = arith.constant 0 : index
    %c0_15 = arith.constant 0 : index
    %38 = vector.load %arg7[%c0_14, %c0_15] : memref<8x32xf32, #tpu.memory_space<vmem>>, vector<8x32xf32>
    tpu.vector_store %arg7[%c0_14, %c0_15], %34 {strides = array<i32>} : memref<8x32xf32, #tpu.memory_space<vmem>>, vector<8x32xf32>,
    %39 = arith.index_cast %c0_i32_2 : i32 to index
    %c0_16 = arith.constant 0 : index
    %c0_17 = arith.constant 0 : index
    %40 = vector.load %arg3[%39, %c0_16, %c0_17] : memref<8x8x32xf32, #tpu.memory_space<vmem>>, vector<1x8x32xf32>
    %41 = vector.shape_cast %40 : vector<1x8x32xf32> to vector<8x32xf32>
    %42 = vector.shape_cast %36 : vector<8x32xf32> to vector<1x8x32xf32>
    tpu.vector_store %arg3[%39, %c0_16, %c0_17], %42 {strides = array<i32>} : memref<8x8x32xf32, #tpu.memory_space<vmem>>, vector<1x8x32xf32>,
    %c1_i32 = arith.constant 1 : i32
    %c0_18 = arith.constant 0 : index
    %c0_19 = arith.constant 0 : index
    %43 = vector.load %arg6[%c0_18, %c0_19] : memref<8x32xf32, #tpu.memory_space<vmem>>, vector<8x32xf32>
    %c0_20 = arith.constant 0 : index
    %c0_21 = arith.constant 0 : index
    %44 = vector.load %arg7[%c0_20, %c0_21] : memref<8x32xf32, #tpu.memory_space<vmem>>, vector<8x32xf32>
    %45 = arith.index_cast %c1_i32 : i32 to index
    %c0_22 = arith.constant 0 : index
    %c0_23 = arith.constant 0 : index
    %46 = vector.load %arg1[%45, %c0_22, %c0_23] : memref<8x8x128xf32, #tpu.memory_space<vmem>>, vector<1x8x128xf32>
    %47 = vector.shape_cast %46 : vector<1x8x128xf32> to vector<8x128xf32>
    %48 = arith.truncf %43 : vector<8x32xf32> to vector<8x32xbf16>
    %cst_24 = arith.constant dense<0.000000e+00> : vector<8x128xf32>
    %49 = tpu.matmul %48, %3, %cst_24 {dimension_numbers = #tpu.dot_dimension_numbers<[1], [0], [0], [1], [0, 0, 1, 1], [], []>} : vector<8x32xbf16>, vector<32x128xbf16>, vector<8x128xf32> -> vector<8x128xf32>
    %50 = arith.addf %47, %49 : vector<8x128xf32>
    %51 = vector.extract_strided_slice %50 {offsets = [0, 0], sizes = [8, 32], strides = [1, 1]} : vector<8x128xf32> to vector<8x32xf32>
    %52 = arith.negf %51 : vector<8x32xf32>
    %53 = math.exp %52 : vector<8x32xf32>
    %cst_25 = arith.constant 1.000000e+00 : f32
    %54 = vector.broadcast %cst_25 : f32 to vector<8x32xf32>
    %55 = arith.addf %54, %53 : vector<8x32xf32>
    %56 = arith.divf %54, %55 : vector<8x32xf32>
    %57 = vector.extract_strided_slice %50 {offsets = [0, 32], sizes = [8, 32], strides = [1, 1]} : vector<8x128xf32> to vector<8x32xf32>
    %58 = arith.negf %57 : vector<8x32xf32>
    %59 = math.exp %58 : vector<8x32xf32>
    %cst_26 = arith.constant 1.000000e+00 : f32
    %60 = vector.broadcast %cst_26 : f32 to vector<8x32xf32>
    %61 = arith.addf %60, %59 : vector<8x32xf32>
    %62 = arith.divf %60, %61 : vector<8x32xf32>
    %63 = vector.extract_strided_slice %50 {offsets = [0, 64], sizes = [8, 32], strides = [1, 1]} : vector<8x128xf32> to vector<8x32xf32>
    %64 = math.tanh %63 : vector<8x32xf32>
    %65 = vector.extract_strided_slice %50 {offsets = [0, 96], sizes = [8, 32], strides = [1, 1]} : vector<8x128xf32> to vector<8x32xf32>
    %66 = arith.negf %65 : vector<8x32xf32>
    %67 = math.exp %66 : vector<8x32xf32>
    %cst_27 = arith.constant 1.000000e+00 : f32
    %68 = vector.broadcast %cst_27 : f32 to vector<8x32xf32>
    %69 = arith.addf %68, %67 : vector<8x32xf32>
    %70 = arith.divf %68, %69 : vector<8x32xf32>
    %71 = arith.mulf %62, %44 : vector<8x32xf32>
    %72 = arith.mulf %56, %64 : vector<8x32xf32>
    %73 = arith.addf %71, %72 : vector<8x32xf32>
    %74 = math.tanh %73 : vector<8x32xf32>
    %75 = arith.mulf %70, %74 : vector<8x32xf32>
    %c0_28 = arith.constant 0 : index
    %c0_29 = arith.constant 0 : index
    %76 = vector.load %arg6[%c0_28, %c0_29] : memref<8x32xf32, #tpu.memory_space<vmem>>, vector<8x32xf32>
    tpu.vector_store %arg6[%c0_28, %c0_29], %75 {strides = array<i32>} : memref<8x32xf32, #tpu.memory_space<vmem>>, vector<8x32xf32>,
    %c0_30 = arith.constant 0 : index
    %c0_31 = arith.constant 0 : index
    %77 = vector.load %arg7[%c0_30, %c0_31] : memref<8x32xf32, #tpu.memory_space<vmem>>, vector<8x32xf32>
    tpu.vector_store %arg7[%c0_30, %c0_31], %73 {strides = array<i32>} : memref<8x32xf32, #tpu.memory_space<vmem>>, vector<8x32xf32>,
    %78 = arith.index_cast %c1_i32 : i32 to index
    %c0_32 = arith.constant 0 : index
    %c0_33 = arith.constant 0 : index
    %79 = vector.load %arg3[%78, %c0_32, %c0_33] : memref<8x8x32xf32, #tpu.memory_space<vmem>>, vector<1x8x32xf32>
    %80 = vector.shape_cast %79 : vector<1x8x32xf32> to vector<8x32xf32>
    %81 = vector.shape_cast %75 : vector<8x32xf32> to vector<1x8x32xf32>
    tpu.vector_store %arg3[%78, %c0_32, %c0_33], %81 {strides = array<i32>} : memref<8x8x32xf32, #tpu.memory_space<vmem>>, vector<1x8x32xf32>,
    %c2_i32 = arith.constant 2 : i32
    %c0_34 = arith.constant 0 : index
    %c0_35 = arith.constant 0 : index
    %82 = vector.load %arg6[%c0_34, %c0_35] : memref<8x32xf32, #tpu.memory_space<vmem>>, vector<8x32xf32>
    %c0_36 = arith.constant 0 : index
    %c0_37 = arith.constant 0 : index
    %83 = vector.load %arg7[%c0_36, %c0_37] : memref<8x32xf32, #tpu.memory_space<vmem>>, vector<8x32xf32>
    %84 = arith.index_cast %c2_i32 : i32 to index
    %c0_38 = arith.constant 0 : index
    %c0_39 = arith.constant 0 : index
    %85 = vector.load %arg1[%84, %c0_38, %c0_39] : memref<8x8x128xf32, #tpu.memory_space<vmem>>, vector<1x8x128xf32>
    %86 = vector.shape_cast %85 : vector<1x8x128xf32> to vector<8x128xf32>
    %87 = arith.truncf %82 : vector<8x32xf32> to vector<8x32xbf16>
    %cst_40 = arith.constant dense<0.000000e+00> : vector<8x128xf32>
    %88 = tpu.matmul %87, %3, %cst_40 {dimension_numbers = #tpu.dot_dimension_numbers<[1], [0], [0], [1], [0, 0, 1, 1], [], []>} : vector<8x32xbf16>, vector<32x128xbf16>, vector<8x128xf32> -> vector<8x128xf32>
    %89 = arith.addf %86, %88 : vector<8x128xf32>
    %90 = vector.extract_strided_slice %89 {offsets = [0, 0], sizes = [8, 32], strides = [1, 1]} : vector<8x128xf32> to vector<8x32xf32>
    %91 = arith.negf %90 : vector<8x32xf32>
    %92 = math.exp %91 : vector<8x32xf32>
    %cst_41 = arith.constant 1.000000e+00 : f32
    %93 = vector.broadcast %cst_41 : f32 to vector<8x32xf32>
    %94 = arith.addf %93, %92 : vector<8x32xf32>
    %95 = arith.divf %93, %94 : vector<8x32xf32>
    %96 = vector.extract_strided_slice %89 {offsets = [0, 32], sizes = [8, 32], strides = [1, 1]} : vector<8x128xf32> to vector<8x32xf32>
    %97 = arith.negf %96 : vector<8x32xf32>
    %98 = math.exp %97 : vector<8x32xf32>
    %cst_42 = arith.constant 1.000000e+00 : f32
    %99 = vector.broadcast %cst_42 : f32 to vector<8x32xf32>
    %100 = arith.addf %99, %98 : vector<8x32xf32>
    %101 = arith.divf %99, %100 : vector<8x32xf32>
    %102 = vector.extract_strided_slice %89 {offsets = [0, 64], sizes = [8, 32], strides = [1, 1]} : vector<8x128xf32> to vector<8x32xf32>
    %103 = math.tanh %102 : vector<8x32xf32>
    %104 = vector.extract_strided_slice %89 {offsets = [0, 96], sizes = [8, 32], strides = [1, 1]} : vector<8x128xf32> to vector<8x32xf32>
    %105 = arith.negf %104 : vector<8x32xf32>
    %106 = math.exp %105 : vector<8x32xf32>
    %cst_43 = arith.constant 1.000000e+00 : f32
    %107 = vector.broadcast %cst_43 : f32 to vector<8x32xf32>
    %108 = arith.addf %107, %106 : vector<8x32xf32>
    %109 = arith.divf %107, %108 : vector<8x32xf32>
    %110 = arith.mulf %101, %83 : vector<8x32xf32>
    %111 = arith.mulf %95, %103 : vector<8x32xf32>
    %112 = arith.addf %110, %111 : vector<8x32xf32>
    %113 = math.tanh %112 : vector<8x32xf32>
    %114 = arith.mulf %109, %113 : vector<8x32xf32>
    %c0_44 = arith.constant 0 : index
    %c0_45 = arith.constant 0 : index
    %115 = vector.load %arg6[%c0_44, %c0_45] : memref<8x32xf32, #tpu.memory_space<vmem>>, vector<8x32xf32>
    tpu.vector_store %arg6[%c0_44, %c0_45], %114 {strides = array<i32>} : memref<8x32xf32, #tpu.memory_space<vmem>>, vector<8x32xf32>,
    %c0_46 = arith.constant 0 : index
    %c0_47 = arith.constant 0 : index
    %116 = vector.load %arg7[%c0_46, %c0_47] : memref<8x32xf32, #tpu.memory_space<vmem>>, vector<8x32xf32>
    tpu.vector_store %arg7[%c0_46, %c0_47], %112 {strides = array<i32>} : memref<8x32xf32, #tpu.memory_space<vmem>>, vector<8x32xf32>,
    %117 = arith.index_cast %c2_i32 : i32 to index
    %c0_48 = arith.constant 0 : index
    %c0_49 = arith.constant 0 : index
    %118 = vector.load %arg3[%117, %c0_48, %c0_49] : memref<8x8x32xf32, #tpu.memory_space<vmem>>, vector<1x8x32xf32>
    %119 = vector.shape_cast %118 : vector<1x8x32xf32> to vector<8x32xf32>
    %120 = vector.shape_cast %114 : vector<8x32xf32> to vector<1x8x32xf32>
    tpu.vector_store %arg3[%117, %c0_48, %c0_49], %120 {strides = array<i32>} : memref<8x8x32xf32, #tpu.memory_space<vmem>>, vector<1x8x32xf32>,
    %c3_i32 = arith.constant 3 : i32
    %c0_50 = arith.constant 0 : index
    %c0_51 = arith.constant 0 : index
    %121 = vector.load %arg6[%c0_50, %c0_51] : memref<8x32xf32, #tpu.memory_space<vmem>>, vector<8x32xf32>
    %c0_52 = arith.constant 0 : index
    %c0_53 = arith.constant 0 : index
    %122 = vector.load %arg7[%c0_52, %c0_53] : memref<8x32xf32, #tpu.memory_space<vmem>>, vector<8x32xf32>
    %123 = arith.index_cast %c3_i32 : i32 to index
    %c0_54 = arith.constant 0 : index
    %c0_55 = arith.constant 0 : index
    %124 = vector.load %arg1[%123, %c0_54, %c0_55] : memref<8x8x128xf32, #tpu.memory_space<vmem>>, vector<1x8x128xf32>
    %125 = vector.shape_cast %124 : vector<1x8x128xf32> to vector<8x128xf32>
    %126 = arith.truncf %121 : vector<8x32xf32> to vector<8x32xbf16>
    %cst_56 = arith.constant dense<0.000000e+00> : vector<8x128xf32>
    %127 = tpu.matmul %126, %3, %cst_56 {dimension_numbers = #tpu.dot_dimension_numbers<[1], [0], [0], [1], [0, 0, 1, 1], [], []>} : vector<8x32xbf16>, vector<32x128xbf16>, vector<8x128xf32> -> vector<8x128xf32>
    %128 = arith.addf %125, %127 : vector<8x128xf32>
    %129 = vector.extract_strided_slice %128 {offsets = [0, 0], sizes = [8, 32], strides = [1, 1]} : vector<8x128xf32> to vector<8x32xf32>
    %130 = arith.negf %129 : vector<8x32xf32>
    %131 = math.exp %130 : vector<8x32xf32>
    %cst_57 = arith.constant 1.000000e+00 : f32
    %132 = vector.broadcast %cst_57 : f32 to vector<8x32xf32>
    %133 = arith.addf %132, %131 : vector<8x32xf32>
    %134 = arith.divf %132, %133 : vector<8x32xf32>
    %135 = vector.extract_strided_slice %128 {offsets = [0, 32], sizes = [8, 32], strides = [1, 1]} : vector<8x128xf32> to vector<8x32xf32>
    %136 = arith.negf %135 : vector<8x32xf32>
    %137 = math.exp %136 : vector<8x32xf32>
    %cst_58 = arith.constant 1.000000e+00 : f32
    %138 = vector.broadcast %cst_58 : f32 to vector<8x32xf32>
    %139 = arith.addf %138, %137 : vector<8x32xf32>
    %140 = arith.divf %138, %139 : vector<8x32xf32>
    %141 = vector.extract_strided_slice %128 {offsets = [0, 64], sizes = [8, 32], strides = [1, 1]} : vector<8x128xf32> to vector<8x32xf32>
    %142 = math.tanh %141 : vector<8x32xf32>
    %143 = vector.extract_strided_slice %128 {offsets = [0, 96], sizes = [8, 32], strides = [1, 1]} : vector<8x128xf32> to vector<8x32xf32>
    %144 = arith.negf %143 : vector<8x32xf32>
    %145 = math.exp %144 : vector<8x32xf32>
    %cst_59 = arith.constant 1.000000e+00 : f32
    %146 = vector.broadcast %cst_59 : f32 to vector<8x32xf32>
    %147 = arith.addf %146, %145 : vector<8x32xf32>
    %148 = arith.divf %146, %147 : vector<8x32xf32>
    %149 = arith.mulf %140, %122 : vector<8x32xf32>
    %150 = arith.mulf %134, %142 : vector<8x32xf32>
    %151 = arith.addf %149, %150 : vector<8x32xf32>
    %152 = math.tanh %151 : vector<8x32xf32>
    %153 = arith.mulf %148, %152 : vector<8x32xf32>
    %c0_60 = arith.constant 0 : index
    %c0_61 = arith.constant 0 : index
    %154 = vector.load %arg6[%c0_60, %c0_61] : memref<8x32xf32, #tpu.memory_space<vmem>>, vector<8x32xf32>
    tpu.vector_store %arg6[%c0_60, %c0_61], %153 {strides = array<i32>} : memref<8x32xf32, #tpu.memory_space<vmem>>, vector<8x32xf32>,
    %c0_62 = arith.constant 0 : index
    %c0_63 = arith.constant 0 : index
    %155 = vector.load %arg7[%c0_62, %c0_63] : memref<8x32xf32, #tpu.memory_space<vmem>>, vector<8x32xf32>
    tpu.vector_store %arg7[%c0_62, %c0_63], %151 {strides = array<i32>} : memref<8x32xf32, #tpu.memory_space<vmem>>, vector<8x32xf32>,
    %156 = arith.index_cast %c3_i32 : i32 to index
    %c0_64 = arith.constant 0 : index
    %c0_65 = arith.constant 0 : index
    %157 = vector.load %arg3[%156, %c0_64, %c0_65] : memref<8x8x32xf32, #tpu.memory_space<vmem>>, vector<1x8x32xf32>
    %158 = vector.shape_cast %157 : vector<1x8x32xf32> to vector<8x32xf32>
    %159 = vector.shape_cast %153 : vector<8x32xf32> to vector<1x8x32xf32>
    tpu.vector_store %arg3[%156, %c0_64, %c0_65], %159 {strides = array<i32>} : memref<8x8x32xf32, #tpu.memory_space<vmem>>, vector<1x8x32xf32>,
    %c4_i32 = arith.constant 4 : i32
    %c0_66 = arith.constant 0 : index
    %c0_67 = arith.constant 0 : index
    %160 = vector.load %arg6[%c0_66, %c0_67] : memref<8x32xf32, #tpu.memory_space<vmem>>, vector<8x32xf32>
    %c0_68 = arith.constant 0 : index
    %c0_69 = arith.constant 0 : index
    %161 = vector.load %arg7[%c0_68, %c0_69] : memref<8x32xf32, #tpu.memory_space<vmem>>, vector<8x32xf32>
    %162 = arith.index_cast %c4_i32 : i32 to index
    %c0_70 = arith.constant 0 : index
    %c0_71 = arith.constant 0 : index
    %163 = vector.load %arg1[%162, %c0_70, %c0_71] : memref<8x8x128xf32, #tpu.memory_space<vmem>>, vector<1x8x128xf32>
    %164 = vector.shape_cast %163 : vector<1x8x128xf32> to vector<8x128xf32>
    %165 = arith.truncf %160 : vector<8x32xf32> to vector<8x32xbf16>
    %cst_72 = arith.constant dense<0.000000e+00> : vector<8x128xf32>
    %166 = tpu.matmul %165, %3, %cst_72 {dimension_numbers = #tpu.dot_dimension_numbers<[1], [0], [0], [1], [0, 0, 1, 1], [], []>} : vector<8x32xbf16>, vector<32x128xbf16>, vector<8x128xf32> -> vector<8x128xf32>
    %167 = arith.addf %164, %166 : vector<8x128xf32>
    %168 = vector.extract_strided_slice %167 {offsets = [0, 0], sizes = [8, 32], strides = [1, 1]} : vector<8x128xf32> to vector<8x32xf32>
    %169 = arith.negf %168 : vector<8x32xf32>
    %170 = math.exp %169 : vector<8x32xf32>
    %cst_73 = arith.constant 1.000000e+00 : f32
    %171 = vector.broadcast %cst_73 : f32 to vector<8x32xf32>
    %172 = arith.addf %171, %170 : vector<8x32xf32>
    %173 = arith.divf %171, %172 : vector<8x32xf32>
    %174 = vector.extract_strided_slice %167 {offsets = [0, 32], sizes = [8, 32], strides = [1, 1]} : vector<8x128xf32> to vector<8x32xf32>
    %175 = arith.negf %174 : vector<8x32xf32>
    %176 = math.exp %175 : vector<8x32xf32>
    %cst_74 = arith.constant 1.000000e+00 : f32
    %177 = vector.broadcast %cst_74 : f32 to vector<8x32xf32>
    %178 = arith.addf %177, %176 : vector<8x32xf32>
    %179 = arith.divf %177, %178 : vector<8x32xf32>
    %180 = vector.extract_strided_slice %167 {offsets = [0, 64], sizes = [8, 32], strides = [1, 1]} : vector<8x128xf32> to vector<8x32xf32>
    %181 = math.tanh %180 : vector<8x32xf32>
    %182 = vector.extract_strided_slice %167 {offsets = [0, 96], sizes = [8, 32], strides = [1, 1]} : vector<8x128xf32> to vector<8x32xf32>
    %183 = arith.negf %182 : vector<8x32xf32>
    %184 = math.exp %183 : vector<8x32xf32>
    %cst_75 = arith.constant 1.000000e+00 : f32
    %185 = vector.broadcast %cst_75 : f32 to vector<8x32xf32>
    %186 = arith.addf %185, %184 : vector<8x32xf32>
    %187 = arith.divf %185, %186 : vector<8x32xf32>
    %188 = arith.mulf %179, %161 : vector<8x32xf32>
    %189 = arith.mulf %173, %181 : vector<8x32xf32>
    %190 = arith.addf %188, %189 : vector<8x32xf32>
    %191 = math.tanh %190 : vector<8x32xf32>
    %192 = arith.mulf %187, %191 : vector<8x32xf32>
    %c0_76 = arith.constant 0 : index
    %c0_77 = arith.constant 0 : index
    %193 = vector.load %arg6[%c0_76, %c0_77] : memref<8x32xf32, #tpu.memory_space<vmem>>, vector<8x32xf32>
    tpu.vector_store %arg6[%c0_76, %c0_77], %192 {strides = array<i32>} : memref<8x32xf32, #tpu.memory_space<vmem>>, vector<8x32xf32>,
    %c0_78 = arith.constant 0 : index
    %c0_79 = arith.constant 0 : index
    %194 = vector.load %arg7[%c0_78, %c0_79] : memref<8x32xf32, #tpu.memory_space<vmem>>, vector<8x32xf32>
    tpu.vector_store %arg7[%c0_78, %c0_79], %190 {strides = array<i32>} : memref<8x32xf32, #tpu.memory_space<vmem>>, vector<8x32xf32>,
    %195 = arith.index_cast %c4_i32 : i32 to index
    %c0_80 = arith.constant 0 : index
    %c0_81 = arith.constant 0 : index
    %196 = vector.load %arg3[%195, %c0_80, %c0_81] : memref<8x8x32xf32, #tpu.memory_space<vmem>>, vector<1x8x32xf32>
    %197 = vector.shape_cast %196 : vector<1x8x32xf32> to vector<8x32xf32>
    %198 = vector.shape_cast %192 : vector<8x32xf32> to vector<1x8x32xf32>
    tpu.vector_store %arg3[%195, %c0_80, %c0_81], %198 {strides = array<i32>} : memref<8x8x32xf32, #tpu.memory_space<vmem>>, vector<1x8x32xf32>,
    %c5_i32 = arith.constant 5 : i32
    %c0_82 = arith.constant 0 : index
    %c0_83 = arith.constant 0 : index
    %199 = vector.load %arg6[%c0_82, %c0_83] : memref<8x32xf32, #tpu.memory_space<vmem>>, vector<8x32xf32>
    %c0_84 = arith.constant 0 : index
    %c0_85 = arith.constant 0 : index
    %200 = vector.load %arg7[%c0_84, %c0_85] : memref<8x32xf32, #tpu.memory_space<vmem>>, vector<8x32xf32>
    %201 = arith.index_cast %c5_i32 : i32 to index
    %c0_86 = arith.constant 0 : index
    %c0_87 = arith.constant 0 : index
    %202 = vector.load %arg1[%201, %c0_86, %c0_87] : memref<8x8x128xf32, #tpu.memory_space<vmem>>, vector<1x8x128xf32>
    %203 = vector.shape_cast %202 : vector<1x8x128xf32> to vector<8x128xf32>
    %204 = arith.truncf %199 : vector<8x32xf32> to vector<8x32xbf16>
    %cst_88 = arith.constant dense<0.000000e+00> : vector<8x128xf32>
    %205 = tpu.matmul %204, %3, %cst_88 {dimension_numbers = #tpu.dot_dimension_numbers<[1], [0], [0], [1], [0, 0, 1, 1], [], []>} : vector<8x32xbf16>, vector<32x128xbf16>, vector<8x128xf32> -> vector<8x128xf32>
    %206 = arith.addf %203, %205 : vector<8x128xf32>
    %207 = vector.extract_strided_slice %206 {offsets = [0, 0], sizes = [8, 32], strides = [1, 1]} : vector<8x128xf32> to vector<8x32xf32>
    %208 = arith.negf %207 : vector<8x32xf32>
    %209 = math.exp %208 : vector<8x32xf32>
    %cst_89 = arith.constant 1.000000e+00 : f32
    %210 = vector.broadcast %cst_89 : f32 to vector<8x32xf32>
    %211 = arith.addf %210, %209 : vector<8x32xf32>
    %212 = arith.divf %210, %211 : vector<8x32xf32>
    %213 = vector.extract_strided_slice %206 {offsets = [0, 32], sizes = [8, 32], strides = [1, 1]} : vector<8x128xf32> to vector<8x32xf32>
    %214 = arith.negf %213 : vector<8x32xf32>
    %215 = math.exp %214 : vector<8x32xf32>
    %cst_90 = arith.constant 1.000000e+00 : f32
    %216 = vector.broadcast %cst_90 : f32 to vector<8x32xf32>
    %217 = arith.addf %216, %215 : vector<8x32xf32>
    %218 = arith.divf %216, %217 : vector<8x32xf32>
    %219 = vector.extract_strided_slice %206 {offsets = [0, 64], sizes = [8, 32], strides = [1, 1]} : vector<8x128xf32> to vector<8x32xf32>
    %220 = math.tanh %219 : vector<8x32xf32>
    %221 = vector.extract_strided_slice %206 {offsets = [0, 96], sizes = [8, 32], strides = [1, 1]} : vector<8x128xf32> to vector<8x32xf32>
    %222 = arith.negf %221 : vector<8x32xf32>
    %223 = math.exp %222 : vector<8x32xf32>
    %cst_91 = arith.constant 1.000000e+00 : f32
    %224 = vector.broadcast %cst_91 : f32 to vector<8x32xf32>
    %225 = arith.addf %224, %223 : vector<8x32xf32>
    %226 = arith.divf %224, %225 : vector<8x32xf32>
    %227 = arith.mulf %218, %200 : vector<8x32xf32>
    %228 = arith.mulf %212, %220 : vector<8x32xf32>
    %229 = arith.addf %227, %228 : vector<8x32xf32>
    %230 = math.tanh %229 : vector<8x32xf32>
    %231 = arith.mulf %226, %230 : vector<8x32xf32>
    %c0_92 = arith.constant 0 : index
    %c0_93 = arith.constant 0 : index
    %232 = vector.load %arg6[%c0_92, %c0_93] : memref<8x32xf32, #tpu.memory_space<vmem>>, vector<8x32xf32>
    tpu.vector_store %arg6[%c0_92, %c0_93], %231 {strides = array<i32>} : memref<8x32xf32, #tpu.memory_space<vmem>>, vector<8x32xf32>,
    %c0_94 = arith.constant 0 : index
    %c0_95 = arith.constant 0 : index
    %233 = vector.load %arg7[%c0_94, %c0_95] : memref<8x32xf32, #tpu.memory_space<vmem>>, vector<8x32xf32>
    tpu.vector_store %arg7[%c0_94, %c0_95], %229 {strides = array<i32>} : memref<8x32xf32, #tpu.memory_space<vmem>>, vector<8x32xf32>,
    %234 = arith.index_cast %c5_i32 : i32 to index
    %c0_96 = arith.constant 0 : index
    %c0_97 = arith.constant 0 : index
    %235 = vector.load %arg3[%234, %c0_96, %c0_97] : memref<8x8x32xf32, #tpu.memory_space<vmem>>, vector<1x8x32xf32>
    %236 = vector.shape_cast %235 : vector<1x8x32xf32> to vector<8x32xf32>
    %237 = vector.shape_cast %231 : vector<8x32xf32> to vector<1x8x32xf32>
    tpu.vector_store %arg3[%234, %c0_96, %c0_97], %237 {strides = array<i32>} : memref<8x8x32xf32, #tpu.memory_space<vmem>>, vector<1x8x32xf32>,
    %c6_i32 = arith.constant 6 : i32
    %c0_98 = arith.constant 0 : index
    %c0_99 = arith.constant 0 : index
    %238 = vector.load %arg6[%c0_98, %c0_99] : memref<8x32xf32, #tpu.memory_space<vmem>>, vector<8x32xf32>
    %c0_100 = arith.constant 0 : index
    %c0_101 = arith.constant 0 : index
    %239 = vector.load %arg7[%c0_100, %c0_101] : memref<8x32xf32, #tpu.memory_space<vmem>>, vector<8x32xf32>
    %240 = arith.index_cast %c6_i32 : i32 to index
    %c0_102 = arith.constant 0 : index
    %c0_103 = arith.constant 0 : index
    %241 = vector.load %arg1[%240, %c0_102, %c0_103] : memref<8x8x128xf32, #tpu.memory_space<vmem>>, vector<1x8x128xf32>
    %242 = vector.shape_cast %241 : vector<1x8x128xf32> to vector<8x128xf32>
    %243 = arith.truncf %238 : vector<8x32xf32> to vector<8x32xbf16>
    %cst_104 = arith.constant dense<0.000000e+00> : vector<8x128xf32>
    %244 = tpu.matmul %243, %3, %cst_104 {dimension_numbers = #tpu.dot_dimension_numbers<[1], [0], [0], [1], [0, 0, 1, 1], [], []>} : vector<8x32xbf16>, vector<32x128xbf16>, vector<8x128xf32> -> vector<8x128xf32>
    %245 = arith.addf %242, %244 : vector<8x128xf32>
    %246 = vector.extract_strided_slice %245 {offsets = [0, 0], sizes = [8, 32], strides = [1, 1]} : vector<8x128xf32> to vector<8x32xf32>
    %247 = arith.negf %246 : vector<8x32xf32>
    %248 = math.exp %247 : vector<8x32xf32>
    %cst_105 = arith.constant 1.000000e+00 : f32
    %249 = vector.broadcast %cst_105 : f32 to vector<8x32xf32>
    %250 = arith.addf %249, %248 : vector<8x32xf32>
    %251 = arith.divf %249, %250 : vector<8x32xf32>
    %252 = vector.extract_strided_slice %245 {offsets = [0, 32], sizes = [8, 32], strides = [1, 1]} : vector<8x128xf32> to vector<8x32xf32>
    %253 = arith.negf %252 : vector<8x32xf32>
    %254 = math.exp %253 : vector<8x32xf32>
    %cst_106 = arith.constant 1.000000e+00 : f32
    %255 = vector.broadcast %cst_106 : f32 to vector<8x32xf32>
    %256 = arith.addf %255, %254 : vector<8x32xf32>
    %257 = arith.divf %255, %256 : vector<8x32xf32>
    %258 = vector.extract_strided_slice %245 {offsets = [0, 64], sizes = [8, 32], strides = [1, 1]} : vector<8x128xf32> to vector<8x32xf32>
    %259 = math.tanh %258 : vector<8x32xf32>
    %260 = vector.extract_strided_slice %245 {offsets = [0, 96], sizes = [8, 32], strides = [1, 1]} : vector<8x128xf32> to vector<8x32xf32>
    %261 = arith.negf %260 : vector<8x32xf32>
    %262 = math.exp %261 : vector<8x32xf32>
    %cst_107 = arith.constant 1.000000e+00 : f32
    %263 = vector.broadcast %cst_107 : f32 to vector<8x32xf32>
    %264 = arith.addf %263, %262 : vector<8x32xf32>
    %265 = arith.divf %263, %264 : vector<8x32xf32>
    %266 = arith.mulf %257, %239 : vector<8x32xf32>
    %267 = arith.mulf %251, %259 : vector<8x32xf32>
    %268 = arith.addf %266, %267 : vector<8x32xf32>
    %269 = math.tanh %268 : vector<8x32xf32>
    %270 = arith.mulf %265, %269 : vector<8x32xf32>
    %c0_108 = arith.constant 0 : index
    %c0_109 = arith.constant 0 : index
    %271 = vector.load %arg6[%c0_108, %c0_109] : memref<8x32xf32, #tpu.memory_space<vmem>>, vector<8x32xf32>
    tpu.vector_store %arg6[%c0_108, %c0_109], %270 {strides = array<i32>} : memref<8x32xf32, #tpu.memory_space<vmem>>, vector<8x32xf32>,
    %c0_110 = arith.constant 0 : index
    %c0_111 = arith.constant 0 : index
    %272 = vector.load %arg7[%c0_110, %c0_111] : memref<8x32xf32, #tpu.memory_space<vmem>>, vector<8x32xf32>
    tpu.vector_store %arg7[%c0_110, %c0_111], %268 {strides = array<i32>} : memref<8x32xf32, #tpu.memory_space<vmem>>, vector<8x32xf32>,
    %273 = arith.index_cast %c6_i32 : i32 to index
    %c0_112 = arith.constant 0 : index
    %c0_113 = arith.constant 0 : index
    %274 = vector.load %arg3[%273, %c0_112, %c0_113] : memref<8x8x32xf32, #tpu.memory_space<vmem>>, vector<1x8x32xf32>
    %275 = vector.shape_cast %274 : vector<1x8x32xf32> to vector<8x32xf32>
    %276 = vector.shape_cast %270 : vector<8x32xf32> to vector<1x8x32xf32>
    tpu.vector_store %arg3[%273, %c0_112, %c0_113], %276 {strides = array<i32>} : memref<8x8x32xf32, #tpu.memory_space<vmem>>, vector<1x8x32xf32>,
    %c7_i32 = arith.constant 7 : i32
    %c0_114 = arith.constant 0 : index
    %c0_115 = arith.constant 0 : index
    %277 = vector.load %arg6[%c0_114, %c0_115] : memref<8x32xf32, #tpu.memory_space<vmem>>, vector<8x32xf32>
    %c0_116 = arith.constant 0 : index
    %c0_117 = arith.constant 0 : index
    %278 = vector.load %arg7[%c0_116, %c0_117] : memref<8x32xf32, #tpu.memory_space<vmem>>, vector<8x32xf32>
    %279 = arith.index_cast %c7_i32 : i32 to index
    %c0_118 = arith.constant 0 : index
    %c0_119 = arith.constant 0 : index
    %280 = vector.load %arg1[%279, %c0_118, %c0_119] : memref<8x8x128xf32, #tpu.memory_space<vmem>>, vector<1x8x128xf32>
    %281 = vector.shape_cast %280 : vector<1x8x128xf32> to vector<8x128xf32>
    %282 = arith.truncf %277 : vector<8x32xf32> to vector<8x32xbf16>
    %cst_120 = arith.constant dense<0.000000e+00> : vector<8x128xf32>
    %283 = tpu.matmul %282, %3, %cst_120 {dimension_numbers = #tpu.dot_dimension_numbers<[1], [0], [0], [1], [0, 0, 1, 1], [], []>} : vector<8x32xbf16>, vector<32x128xbf16>, vector<8x128xf32> -> vector<8x128xf32>
    %284 = arith.addf %281, %283 : vector<8x128xf32>
    %285 = vector.extract_strided_slice %284 {offsets = [0, 0], sizes = [8, 32], strides = [1, 1]} : vector<8x128xf32> to vector<8x32xf32>
    %286 = arith.negf %285 : vector<8x32xf32>
    %287 = math.exp %286 : vector<8x32xf32>
    %cst_121 = arith.constant 1.000000e+00 : f32
    %288 = vector.broadcast %cst_121 : f32 to vector<8x32xf32>
    %289 = arith.addf %288, %287 : vector<8x32xf32>
    %290 = arith.divf %288, %289 : vector<8x32xf32>
    %291 = vector.extract_strided_slice %284 {offsets = [0, 32], sizes = [8, 32], strides = [1, 1]} : vector<8x128xf32> to vector<8x32xf32>
    %292 = arith.negf %291 : vector<8x32xf32>
    %293 = math.exp %292 : vector<8x32xf32>
    %cst_122 = arith.constant 1.000000e+00 : f32
    %294 = vector.broadcast %cst_122 : f32 to vector<8x32xf32>
    %295 = arith.addf %294, %293 : vector<8x32xf32>
    %296 = arith.divf %294, %295 : vector<8x32xf32>
    %297 = vector.extract_strided_slice %284 {offsets = [0, 64], sizes = [8, 32], strides = [1, 1]} : vector<8x128xf32> to vector<8x32xf32>
    %298 = math.tanh %297 : vector<8x32xf32>
    %299 = vector.extract_strided_slice %284 {offsets = [0, 96], sizes = [8, 32], strides = [1, 1]} : vector<8x128xf32> to vector<8x32xf32>
    %300 = arith.negf %299 : vector<8x32xf32>
    %301 = math.exp %300 : vector<8x32xf32>
    %cst_123 = arith.constant 1.000000e+00 : f32
    %302 = vector.broadcast %cst_123 : f32 to vector<8x32xf32>
    %303 = arith.addf %302, %301 : vector<8x32xf32>
    %304 = arith.divf %302, %303 : vector<8x32xf32>
    %305 = arith.mulf %296, %278 : vector<8x32xf32>
    %306 = arith.mulf %290, %298 : vector<8x32xf32>
    %307 = arith.addf %305, %306 : vector<8x32xf32>
    %308 = math.tanh %307 : vector<8x32xf32>
    %309 = arith.mulf %304, %308 : vector<8x32xf32>
    %c0_124 = arith.constant 0 : index
    %c0_125 = arith.constant 0 : index
    %310 = vector.load %arg6[%c0_124, %c0_125] : memref<8x32xf32, #tpu.memory_space<vmem>>, vector<8x32xf32>
    tpu.vector_store %arg6[%c0_124, %c0_125], %309 {strides = array<i32>} : memref<8x32xf32, #tpu.memory_space<vmem>>, vector<8x32xf32>,
    %c0_126 = arith.constant 0 : index
    %c0_127 = arith.constant 0 : index
    %311 = vector.load %arg7[%c0_126, %c0_127] : memref<8x32xf32, #tpu.memory_space<vmem>>, vector<8x32xf32>
    tpu.vector_store %arg7[%c0_126, %c0_127], %307 {strides = array<i32>} : memref<8x32xf32, #tpu.memory_space<vmem>>, vector<8x32xf32>,
    %312 = arith.index_cast %c7_i32 : i32 to index
    %c0_128 = arith.constant 0 : index
    %c0_129 = arith.constant 0 : index
    %313 = vector.load %arg3[%312, %c0_128, %c0_129] : memref<8x8x32xf32, #tpu.memory_space<vmem>>, vector<1x8x32xf32>
    %314 = vector.shape_cast %313 : vector<1x8x32xf32> to vector<8x32xf32>
    %315 = vector.shape_cast %309 : vector<8x32xf32> to vector<1x8x32xf32>
    tpu.vector_store %arg3[%312, %c0_128, %c0_129], %315 {strides = array<i32>} : memref<8x8x32xf32, #tpu.memory_space<vmem>>, vector<1x8x32xf32>,
    %c8_i32 = arith.constant 8 : i32
    %c0_130 = arith.constant 0 : index
    %c0_131 = arith.constant 0 : index
    %316 = vector.load %arg6[%c0_130, %c0_131] : memref<8x32xf32, #tpu.memory_space<vmem>>, vector<8x32xf32>
    %c0_132 = arith.constant 0 : index
    %c0_133 = arith.constant 0 : index
    %317 = vector.load %arg4[%c0_132, %c0_133] : memref<8x32xf32, #tpu.memory_space<vmem>>, vector<8x32xf32>
    tpu.vector_store %arg4[%c0_132, %c0_133], %316 {strides = array<i32>} : memref<8x32xf32, #tpu.memory_space<vmem>>, vector<8x32xf32>,
    %c0_134 = arith.constant 0 : index
    %c0_135 = arith.constant 0 : index
    %318 = vector.load %arg7[%c0_134, %c0_135] : memref<8x32xf32, #tpu.memory_space<vmem>>, vector<8x32xf32>
    %c0_136 = arith.constant 0 : index
    %c0_137 = arith.constant 0 : index
    %319 = vector.load %arg5[%c0_136, %c0_137] : memref<8x32xf32, #tpu.memory_space<vmem>>, vector<8x32xf32>
    tpu.vector_store %arg5[%c0_136, %c0_137], %318 {strides = array<i32>} : memref<8x32xf32, #tpu.memory_space<vmem>>, vector<8x32xf32>,
    return
  }
  func.func @transform_0(%arg0: i32) -> (i32, i32, i32) {
    %c0_i32 = arith.constant 0 : i32
    %c0_i32_0 = arith.constant 0 : i32
    %c0_i32_1 = arith.constant 0 : i32
    return %arg0, %c0_i32, %c0_i32_0 : i32, i32, i32
  }
  func.func @transform_1(%arg0: i32) -> (i32, i32) {
    %c0_i32 = arith.constant 0 : i32
    %c0_i32_0 = arith.constant 0 : i32
    %c0_i32_1 = arith.constant 0 : i32
    return %c0_i32, %c0_i32_0 : i32, i32
  }
  func.func @transform_2(%arg0: i32) -> (i32, i32, i32) {
    %c0_i32 = arith.constant 0 : i32
    %c0_i32_0 = arith.constant 0 : i32
    %c0_i32_1 = arith.constant 0 : i32
    return %arg0, %c0_i32, %c0_i32_0 : i32, i32, i32
  }
  func.func @transform_3(%arg0: i32) -> (i32, i32) {
    %c0_i32 = arith.constant 0 : i32
    %c0_i32_0 = arith.constant 0 : i32
    %c0_i32_1 = arith.constant 0 : i32
    return %c0_i32, %c0_i32_0 : i32, i32
  }
  func.func @transform_4(%arg0: i32) -> (i32, i32) {
    %c0_i32 = arith.constant 0 : i32
    %c0_i32_0 = arith.constant 0 : i32
    %c0_i32_1 = arith.constant 0 : i32
    return %c0_i32, %c0_i32_0 : i32, i32
  }
}

</mosaic_0001>

<llo_original>
// kernel: encoder_forward.2
$region0: #{encoder_forward.2}
  #allocation0 [shape = 'u32[]', space=smem, size = 0x4, offset = 0x4, fixed_abs, tag = 'smem constant byte address 0x4 - core index']
  #allocation1 [shape = 'u32[144,128]{1,0:T(1,128)}', space=vmem, size = 0x12000, scoped, tag = 'internal scratch']
  #allocation2 [shape = 'f32[8,32]{1,0:T(8,128)}', space=vmem, size = 0x1000, scoped, tag = 'scratch operand']
  #allocation3 [shape = 'f32[8,32]{1,0:T(8,128)}', space=vmem, size = 0x1000, scoped, tag = 'scratch operand']
  %s0 = inlined_call_operand.vmem [shape: f32[8,8,128], index: 0, kind: input, shape index: {}]
  %s1 = inlined_call_operand.vmem [shape: bf16[32,128], index: 1, kind: input, shape index: {}]
  %s2 = inlined_call_operand.vmem [shape: f32[8,8,32], index: 2, kind: output, shape index: {0}]
  %s3 = inlined_call_operand.vmem [shape: f32[8,32], index: 3, kind: output, shape index: {1}]
  %s4 = inlined_call_operand.vmem [shape: f32[8,32], index: 4, kind: output, shape index: {2}]
  %5 = xla_tuple %s2, %s3, %s4
  %s6 = sld [smem:[#allocation0]]
  $region38: #{encoder_forward.2} parent=0
    _
  %s8 = ssub.s32 1, %s6
  %s9 = scalar_select 0, %s8, %s6
  // Predicated region
  $region2: #{encoder_forward.2} parent=0 // pred_check
    _
  $region3: #{encoder_forward.2} parent=0 // pred_check_branch
    %11 = sbr.rel (0) target = $region5
  $region4: #{encoder_forward.2} parent=0 // pred_region
    _
  $region5: #{encoder_forward.2} parent=0 // pred_fallthru
    _
  // Predicated region
  $region6: #{encoder_forward.2} parent=0 // pred_check
    _
  $region7: #{encoder_forward.2} parent=0 // pred_check_branch
    %13 = sbr.rel (0) target = $region9
  $region8: #{encoder_forward.2} parent=0 // pred_region
    _
  $region9: #{encoder_forward.2} parent=0 // pred_fallthru
    _
  %p15 = scmp.eq.s32.totalorder 0, 0
  // Predicated region
  $region10: #{encoder_forward.2} parent=0 // pred_check
    %p16 = pneg %p15
  $region11: #{encoder_forward.2} parent=0 // pred_check_branch
    %18 = sbr.rel (%p16) target = $region13
  $region12: #{encoder_forward.2} parent=0 // pred_region
    %vm19 = vcmask 261120
    %20 = vst.msk [vmem:[#allocation2] sm:$0xff] %vm19, 0.0
    %21 = vst.msk [vmem:[#allocation3] sm:$0xff] %vm19, 0.0
  $region13: #{encoder_forward.2} parent=0 // pred_fallthru
    _
  %v22 = vld [vmem:[%s1] sm:$0xf]
  %v23 = vld [vmem:[%s1 + $0x4] sm:$0xf]
  %v24 = vld [vmem:[%s1 + $0x8] sm:$0xf]
  %v25 = vld [vmem:[%s1 + $0xc] sm:$0xf]
  %v26 = vld [vmem:[#allocation2] sm:$0xff]
  %v27 = vld [vmem:[#allocation3] sm:$0xff]
  %v28 = vld [vmem:[%s0] sm:$0xff]
  %v29 = vpack.c.bf16 %v26, %v26
  %v34 = vunpack.c.l.b16 %v22
  %v35 = vunpack.c.l.b16 %v23
  %v36 = vunpack.c.l.b16 %v24
  %v37 = vunpack.c.l.b16 %v25
  %v38 = vpack.c.b16 %v35, %v34
  %v39 = vpack.c.b16 %v37, %v36
  %vm42 = vcmask 261120
  %v44 = vsel %vm42, %v29, 0
  %46 = vmatprep.subr.bf16.mxu0 0
  %47 = vmatpush1.bf16.msra.mxu0 0
  %48 = vmatprep.subr.bf16.mxu0 0
  %49 = vmatpush1.bf16.msra.mxu0 0
  %50 = vmatprep.subr.bf16.mxu0 0
  %51 = vmatpush1.bf16.msra.mxu0 0
  %52 = vmatprep.subr.bf16.mxu0 0
  %53 = vmatpush1.bf16.msra.mxu0 0
  %54 = vmatprep.subr.bf16.mxu0 0
  %55 = vmatpush1.bf16.msra.mxu0 0
  %56 = vmatprep.subr.bf16.mxu0 0
  %57 = vmatpush1.bf16.msra.mxu0 0
  %58 = vmatprep.subr.bf16.mxu0 0
  %59 = vmatpush1.bf16.msra.mxu0 %v39
  %60 = vmatprep.subr.bf16.mxu0 0
  %61 = vmatpush1.bf16.msra.mxu0 %v38
  %62 = vmatprep.subr.bf16.mxu0 0
  %63 = vmatpush2.bf16.msra.mxu0 0
  %64 = vmatprep.subr.bf16.mxu0 0
  %65 = vmatpush2.bf16.msra.mxu0 0
  %66 = vmatprep.subr.bf16.mxu0 0
  %67 = vmatpush2.bf16.msra.mxu0 0
  %68 = vmatprep.subr.bf16.mxu0 0
  %69 = vmatpush2.bf16.msra.mxu0 0
  %70 = vmatprep.subr.bf16.mxu0 0
  %71 = vmatpush2.bf16.msra.mxu0 0
  %72 = vmatprep.subr.bf16.mxu0 0
  %73 = vmatpush2.bf16.msra.mxu0 0
  %74 = vmatprep.subr.bf16.mxu0 0
  %75 = vmatpush2.bf16.msra.mxu0 0
  %76 = vmatprep.subr.bf16.mxu0 0
  %77 = vmatpush2.bf16.msra.mxu0 0
  %78 = vmatprep.mubr.bf16.mxu0 0
  %79 = vmatmul.mubr.bf16.gmra.mxu0 %v44
  %v80 = vpop.f32.mrf.mxu0
  %v81 = vadd.f32 0.0, %v80
  %v82 = vpop.f32.mrf.mxu0
  %v83 = vpop.f32.mrf.mxu0
  %v84 = vpop.f32.mrf.mxu0
  %85 = vdwg.mxu0
  %v86 = vadd.f32 %v28, %v81
  %v87 = vxor.u32 %v86, 2147483648
  %v88 = vmul.f32 %v87, 1.442695
  %v89 = vpow.pop %v88
  %v90 = vadd.f32 %v89, 1.0
  %v91 = vrcp.pop %v90
  %v92 = vmul.f32 1.0, %v91
  %v93 = vtanh.pop %v86
  %95 = vrot.lane.b32.xlu0 %v27, 32
  %v96 = vpop.permute.xlu0 %95
  %v98 = vmul.f32 %v92, %v96
  %100 = vrot.lane.b32.xlu0 %v93, 64
  %v101 = vpop.permute.xlu0 %100
  %v103 = vmul.f32 %v92, %v101
  %105 = vrot.lane.b32.xlu0 %v103, 32
  %v106 = vpop.permute.xlu0 %105
  %v108 = vadd.f32 %v98, %v106
  %v109 = vtanh.pop %v108
  %111 = vrot.lane.b32.xlu0 %v109, 64
  %v112 = vpop.permute.xlu0 %111
  %v114 = vmul.f32 %v92, %v112
  %116 = vrot.lane.b32.xlu0 %v114, 32
  %v117 = vpop.permute.xlu0 %116
  %119 = vst.msk [vmem:[#allocation2] sm:$0xff] %vm42, %v117
  %121 = vrot.lane.b32.xlu0 %v108, 96
  %v122 = vpop.permute.xlu0 %121
  %124 = vst.msk [vmem:[#allocation3] sm:$0xff] %vm42, %v122
  %125 = vst.msk [vmem:[%s2] sm:$0xff] %vm42, %v117
  %v126 = vld [vmem:[#allocation2] sm:$0xff]
  %v127 = vld [vmem:[#allocation3] sm:$0xff]
  %s128 = scalar_lea.vmem %s0, 8
  %v129 = vld [vmem:[%s128] sm:$0xff]
  %v130 = vpack.c.bf16 %v126, %v126
  %v132 = vsel %vm42, %v130, 0
  %134 = vmatprep.subr.bf16.mxu0 0
  %135 = vmatpush1.bf16.msra.mxu0 0
  %136 = vmatprep.subr.bf16.mxu0 0
  %137 = vmatpush1.bf16.msra.mxu0 0
  %138 = vmatprep.subr.bf16.mxu0 0
  %139 = vmatpush1.bf16.msra.mxu0 0
  %140 = vmatprep.subr.bf16.mxu0 0
  %141 = vmatpush1.bf16.msra.mxu0 0
  %142 = vmatprep.subr.bf16.mxu0 0
  %143 = vmatpush1.bf16.msra.mxu0 0
  %144 = vmatprep.subr.bf16.mxu0 0
  %145 = vmatpush1.bf16.msra.mxu0 0
  %146 = vmatprep.subr.bf16.mxu0 0
  %147 = vmatpush1.bf16.msra.mxu0 %v39
  %148 = vmatprep.subr.bf16.mxu0 0
  %149 = vmatpush1.bf16.msra.mxu0 %v38
  %150 = vmatprep.subr.bf16.mxu0 0
  %151 = vmatpush2.bf16.msra.mxu0 0
  %152 = vmatprep.subr.bf16.mxu0 0
  %153 = vmatpush2.bf16.msra.mxu0 0
  %154 = vmatprep.subr.bf16.mxu0 0
  %155 = vmatpush2.bf16.msra.mxu0 0
  %156 = vmatprep.subr.bf16.mxu0 0
  %157 = vmatpush2.bf16.msra.mxu0 0
  %158 = vmatprep.subr.bf16.mxu0 0
  %159 = vmatpush2.bf16.msra.mxu0 0
  %160 = vmatprep.subr.bf16.mxu0 0
  %161 = vmatpush2.bf16.msra.mxu0 0
  %162 = vmatprep.subr.bf16.mxu0 0
  %163 = vmatpush2.bf16.msra.mxu0 0
  %164 = vmatprep.subr.bf16.mxu0 0
  %165 = vmatpush2.bf16.msra.mxu0 0
  %166 = vmatprep.mubr.bf16.mxu0 0
  %167 = vmatmul.mubr.bf16.gmra.mxu0 %v132
  %v168 = vpop.f32.mrf.mxu0
  %v169 = vadd.f32 0.0, %v168
  %v170 = vpop.f32.mrf.mxu0
  %v171 = vpop.f32.mrf.mxu0
  %v172 = vpop.f32.mrf.mxu0
  %173 = vdwg.mxu0
  %v174 = vadd.f32 %v129, %v169
  %v175 = vxor.u32 %v174, 2147483648
  %v176 = vmul.f32 %v175, 1.442695
  %v177 = vpow.pop %v176
  %v178 = vadd.f32 %v177, 1.0
  %v179 = vrcp.pop %v178
  %v180 = vmul.f32 1.0, %v179
  %v181 = vtanh.pop %v174
  %183 = vrot.lane.b32.xlu0 %v127, 32
  %v184 = vpop.permute.xlu0 %183
  %v186 = vmul.f32 %v180, %v184
  %188 = vrot.lane.b32.xlu0 %v181, 64
  %v189 = vpop.permute.xlu0 %188
  %v191 = vmul.f32 %v180, %v189
  %193 = vrot.lane.b32.xlu0 %v191, 32
  %v194 = vpop.permute.xlu0 %193
  %v196 = vadd.f32 %v186, %v194
  %v197 = vtanh.pop %v196
  %199 = vrot.lane.b32.xlu0 %v197, 64
  %v200 = vpop.permute.xlu0 %199
  %v202 = vmul.f32 %v180, %v200
  %204 = vrot.lane.b32.xlu0 %v202, 32
  %v205 = vpop.permute.xlu0 %204
  %207 = vst.msk [vmem:[#allocation2] sm:$0xff] %vm42, %v205
  %209 = vrot.lane.b32.xlu0 %v196, 96
  %v210 = vpop.permute.xlu0 %209
  %212 = vst.msk [vmem:[#allocation3] sm:$0xff] %vm42, %v210
  %s213 = scalar_lea.vmem %s2, 8
  %214 = vst.msk [vmem:[%s213] sm:$0xff] %vm42, %v205
  %v215 = vld [vmem:[#allocation2] sm:$0xff]
  %v216 = vld [vmem:[#allocation3] sm:$0xff]
  %s217 = scalar_lea.vmem %s0, 16
  %v218 = vld [vmem:[%s217] sm:$0xff]
  %v219 = vpack.c.bf16 %v215, %v215
  %v221 = vsel %vm42, %v219, 0
  %223 = vmatprep.subr.bf16.mxu0 0
  %224 = vmatpush1.bf16.msra.mxu0 0
  %225 = vmatprep.subr.bf16.mxu0 0
  %226 = vmatpush1.bf16.msra.mxu0 0
  %227 = vmatprep.subr.bf16.mxu0 0
  %228 = vmatpush1.bf16.msra.mxu0 0
  %229 = vmatprep.subr.bf16.mxu0 0
  %230 = vmatpush1.bf16.msra.mxu0 0
  %231 = vmatprep.subr.bf16.mxu0 0
  %232 = vmatpush1.bf16.msra.mxu0 0
  %233 = vmatprep.subr.bf16.mxu0 0
  %234 = vmatpush1.bf16.msra.mxu0 0
  %235 = vmatprep.subr.bf16.mxu0 0
  %236 = vmatpush1.bf16.msra.mxu0 %v39
  %237 = vmatprep.subr.bf16.mxu0 0
  %238 = vmatpush1.bf16.msra.mxu0 %v38
  %239 = vmatprep.subr.bf16.mxu0 0
  %240 = vmatpush2.bf16.msra.mxu0 0
  %241 = vmatprep.subr.bf16.mxu0 0
  %242 = vmatpush2.bf16.msra.mxu0 0
  %243 = vmatprep.subr.bf16.mxu0 0
  %244 = vmatpush2.bf16.msra.mxu0 0
  %245 = vmatprep.subr.bf16.mxu0 0
  %246 = vmatpush2.bf16.msra.mxu0 0
  %247 = vmatprep.subr.bf16.mxu0 0
  %248 = vmatpush2.bf16.msra.mxu0 0
  %249 = vmatprep.subr.bf16.mxu0 0
  %250 = vmatpush2.bf16.msra.mxu0 0
  %251 = vmatprep.subr.bf16.mxu0 0
  %252 = vmatpush2.bf16.msra.mxu0 0
  %253 = vmatprep.subr.bf16.mxu0 0
  %254 = vmatpush2.bf16.msra.mxu0 0
  %255 = vmatprep.mubr.bf16.mxu0 0
  %256 = vmatmul.mubr.bf16.gmra.mxu0 %v221
  %v257 = vpop.f32.mrf.mxu0
  %v258 = vadd.f32 0.0, %v257
  %v259 = vpop.f32.mrf.mxu0
  %v260 = vpop.f32.mrf.mxu0
  %v261 = vpop.f32.mrf.mxu0
  %262 = vdwg.mxu0
  %v263 = vadd.f32 %v218, %v258
  %v264 = vxor.u32 %v263, 2147483648
  %v265 = vmul.f32 %v264, 1.442695
  %v266 = vpow.pop %v265
  %v267 = vadd.f32 %v266, 1.0
  %v268 = vrcp.pop %v267
  %v269 = vmul.f32 1.0, %v268
  %v270 = vtanh.pop %v263
  %272 = vrot.lane.b32.xlu0 %v216, 32
  %v273 = vpop.permute.xlu0 %272
  %v275 = vmul.f32 %v269, %v273
  %277 = vrot.lane.b32.xlu0 %v270, 64
  %v278 = vpop.permute.xlu0 %277
  %v280 = vmul.f32 %v269, %v278
  %282 = vrot.lane.b32.xlu0 %v280, 32
  %v283 = vpop.permute.xlu0 %282
  %v285 = vadd.f32 %v275, %v283
  %v286 = vtanh.pop %v285
  %288 = vrot.lane.b32.xlu0 %v286, 64
  %v289 = vpop.permute.xlu0 %288
  %v291 = vmul.f32 %v269, %v289
  %293 = vrot.lane.b32.xlu0 %v291, 32
  %v294 = vpop.permute.xlu0 %293
  %296 = vst.msk [vmem:[#allocation2] sm:$0xff] %vm42, %v294
  %298 = vrot.lane.b32.xlu0 %v285, 96
  %v299 = vpop.permute.xlu0 %298
  %301 = vst.msk [vmem:[#allocation3] sm:$0xff] %vm42, %v299
  %s302 = scalar_lea.vmem %s2, 16
  %303 = vst.msk [vmem:[%s302] sm:$0xff] %vm42, %v294
  %v304 = vld [vmem:[#allocation2] sm:$0xff]
  %v305 = vld [vmem:[#allocation3] sm:$0xff]
  %s306 = scalar_lea.vmem %s0, 24
  %v307 = vld [vmem:[%s306] sm:$0xff]
  %v308 = vpack.c.bf16 %v304, %v304
  %v310 = vsel %vm42, %v308, 0
  %312 = vmatprep.subr.bf16.mxu0 0
  %313 = vmatpush1.bf16.msra.mxu0 0
  %314 = vmatprep.subr.bf16.mxu0 0
  %315 = vmatpush1.bf16.msra.mxu0 0
  %316 = vmatprep.subr.bf16.mxu0 0
  %317 = vmatpush1.bf16.msra.mxu0 0
  %318 = vmatprep.subr.bf16.mxu0 0
  %319 = vmatpush1.bf16.msra.mxu0 0
  %320 = vmatprep.subr.bf16.mxu0 0
  %321 = vmatpush1.bf16.msra.mxu0 0
  %322 = vmatprep.subr.bf16.mxu0 0
  %323 = vmatpush1.bf16.msra.mxu0 0
  %324 = vmatprep.subr.bf16.mxu0 0
  %325 = vmatpush1.bf16.msra.mxu0 %v39
  %326 = vmatprep.subr.bf16.mxu0 0
  %327 = vmatpush1.bf16.msra.mxu0 %v38
  %328 = vmatprep.subr.bf16.mxu0 0
  %329 = vmatpush2.bf16.msra.mxu0 0
  %330 = vmatprep.subr.bf16.mxu0 0
  %331 = vmatpush2.bf16.msra.mxu0 0
  %332 = vmatprep.subr.bf16.mxu0 0
  %333 = vmatpush2.bf16.msra.mxu0 0
  %334 = vmatprep.subr.bf16.mxu0 0
  %335 = vmatpush2.bf16.msra.mxu0 0
  %336 = vmatprep.subr.bf16.mxu0 0
  %337 = vmatpush2.bf16.msra.mxu0 0
  %338 = vmatprep.subr.bf16.mxu0 0
  %339 = vmatpush2.bf16.msra.mxu0 0
  %340 = vmatprep.subr.bf16.mxu0 0
  %341 = vmatpush2.bf16.msra.mxu0 0
  %342 = vmatprep.subr.bf16.mxu0 0
  %343 = vmatpush2.bf16.msra.mxu0 0
  %344 = vmatprep.mubr.bf16.mxu0 0
  %345 = vmatmul.mubr.bf16.gmra.mxu0 %v310
  %v346 = vpop.f32.mrf.mxu0
  %v347 = vadd.f32 0.0, %v346
  %v348 = vpop.f32.mrf.mxu0
  %v349 = vpop.f32.mrf.mxu0
  %v350 = vpop.f32.mrf.mxu0
  %351 = vdwg.mxu0
  %v352 = vadd.f32 %v307, %v347
  %v353 = vxor.u32 %v352, 2147483648
  %v354 = vmul.f32 %v353, 1.442695
  %v355 = vpow.pop %v354
  %v356 = vadd.f32 %v355, 1.0
  %v357 = vrcp.pop %v356
  %v358 = vmul.f32 1.0, %v357
  %v359 = vtanh.pop %v352
  %361 = vrot.lane.b32.xlu0 %v305, 32
  %v362 = vpop.permute.xlu0 %361
  %v364 = vmul.f32 %v358, %v362
  %366 = vrot.lane.b32.xlu0 %v359, 64
  %v367 = vpop.permute.xlu0 %366
  %v369 = vmul.f32 %v358, %v367
  %371 = vrot.lane.b32.xlu0 %v369, 32
  %v372 = vpop.permute.xlu0 %371
  %v374 = vadd.f32 %v364, %v372
  %v375 = vtanh.pop %v374
  %377 = vrot.lane.b32.xlu0 %v375, 64
  %v378 = vpop.permute.xlu0 %377
  %v380 = vmul.f32 %v358, %v378
  %382 = vrot.lane.b32.xlu0 %v380, 32
  %v383 = vpop.permute.xlu0 %382
  %385 = vst.msk [vmem:[#allocation2] sm:$0xff] %vm42, %v383
  %387 = vrot.lane.b32.xlu0 %v374, 96
  %v388 = vpop.permute.xlu0 %387
  %390 = vst.msk [vmem:[#allocation3] sm:$0xff] %vm42, %v388
  %s391 = scalar_lea.vmem %s2, 24
  %392 = vst.msk [vmem:[%s391] sm:$0xff] %vm42, %v383
  %v393 = vld [vmem:[#allocation2] sm:$0xff]
  %v394 = vld [vmem:[#allocation3] sm:$0xff]
  %s395 = scalar_lea.vmem %s0, 32
  %v396 = vld [vmem:[%s395] sm:$0xff]
  %v397 = vpack.c.bf16 %v393, %v393
  %v399 = vsel %vm42, %v397, 0
  %401 = vmatprep.subr.bf16.mxu0 0
  %402 = vmatpush1.bf16.msra.mxu0 0
  %403 = vmatprep.subr.bf16.mxu0 0
  %404 = vmatpush1.bf16.msra.mxu0 0
  %405 = vmatprep.subr.bf16.mxu0 0
  %406 = vmatpush1.bf16.msra.mxu0 0
  %407 = vmatprep.subr.bf16.mxu0 0
  %408 = vmatpush1.bf16.msra.mxu0 0
  %409 = vmatprep.subr.bf16.mxu0 0
  %410 = vmatpush1.bf16.msra.mxu0 0
  %411 = vmatprep.subr.bf16.mxu0 0
  %412 = vmatpush1.bf16.msra.mxu0 0
  %413 = vmatprep.subr.bf16.mxu0 0
  %414 = vmatpush1.bf16.msra.mxu0 %v39
  %415 = vmatprep.subr.bf16.mxu0 0
  %416 = vmatpush1.bf16.msra.mxu0 %v38
  %417 = vmatprep.subr.bf16.mxu0 0
  %418 = vmatpush2.bf16.msra.mxu0 0
  %419 = vmatprep.subr.bf16.mxu0 0
  %420 = vmatpush2.bf16.msra.mxu0 0
  %421 = vmatprep.subr.bf16.mxu0 0
  %422 = vmatpush2.bf16.msra.mxu0 0
  %423 = vmatprep.subr.bf16.mxu0 0
  %424 = vmatpush2.bf16.msra.mxu0 0
  %425 = vmatprep.subr.bf16.mxu0 0
  %426 = vmatpush2.bf16.msra.mxu0 0
  %427 = vmatprep.subr.bf16.mxu0 0
  %428 = vmatpush2.bf16.msra.mxu0 0
  %429 = vmatprep.subr.bf16.mxu0 0
  %430 = vmatpush2.bf16.msra.mxu0 0
  %431 = vmatprep.subr.bf16.mxu0 0
  %432 = vmatpush2.bf16.msra.mxu0 0
  %433 = vmatprep.mubr.bf16.mxu0 0
  %434 = vmatmul.mubr.bf16.gmra.mxu0 %v399
  %v435 = vpop.f32.mrf.mxu0
  %v436 = vadd.f32 0.0, %v435
  %v437 = vpop.f32.mrf.mxu0
  %v438 = vpop.f32.mrf.mxu0
  %v439 = vpop.f32.mrf.mxu0
  %440 = vdwg.mxu0
  %v441 = vadd.f32 %v396, %v436
  %v442 = vxor.u32 %v441, 2147483648
  %v443 = vmul.f32 %v442, 1.442695
  %v444 = vpow.pop %v443
  %v445 = vadd.f32 %v444, 1.0
  %v446 = vrcp.pop %v445
  %v447 = vmul.f32 1.0, %v446
  %v448 = vtanh.pop %v441
  %450 = vrot.lane.b32.xlu0 %v394, 32
  %v451 = vpop.permute.xlu0 %450
  %v453 = vmul.f32 %v447, %v451
  %455 = vrot.lane.b32.xlu0 %v448, 64
  %v456 = vpop.permute.xlu0 %455
  %v458 = vmul.f32 %v447, %v456
  %460 = vrot.lane.b32.xlu0 %v458, 32
  %v461 = vpop.permute.xlu0 %460
  %v463 = vadd.f32 %v453, %v461
  %v464 = vtanh.pop %v463
  %466 = vrot.lane.b32.xlu0 %v464, 64
  %v467 = vpop.permute.xlu0 %466
  %v469 = vmul.f32 %v447, %v467
  %471 = vrot.lane.b32.xlu0 %v469, 32
  %v472 = vpop.permute.xlu0 %471
  %474 = vst.msk [vmem:[#allocation2] sm:$0xff] %vm42, %v472
  %476 = vrot.lane.b32.xlu0 %v463, 96
  %v477 = vpop.permute.xlu0 %476
  %479 = vst.msk [vmem:[#allocation3] sm:$0xff] %vm42, %v477
  %s480 = scalar_lea.vmem %s2, 32
  %481 = vst.msk [vmem:[%s480] sm:$0xff] %vm42, %v472
  %v482 = vld [vmem:[#allocation2] sm:$0xff]
  %v483 = vld [vmem:[#allocation3] sm:$0xff]
  %s484 = scalar_lea.vmem %s0, 40
  %v485 = vld [vmem:[%s484] sm:$0xff]
  %v486 = vpack.c.bf16 %v482, %v482
  %v488 = vsel %vm42, %v486, 0
  %490 = vmatprep.subr.bf16.mxu0 0
  %491 = vmatpush1.bf16.msra.mxu0 0
  %492 = vmatprep.subr.bf16.mxu0 0
  %493 = vmatpush1.bf16.msra.mxu0 0
  %494 = vmatprep.subr.bf16.mxu0 0
  %495 = vmatpush1.bf16.msra.mxu0 0
  %496 = vmatprep.subr.bf16.mxu0 0
  %497 = vmatpush1.bf16.msra.mxu0 0
  %498 = vmatprep.subr.bf16.mxu0 0
  %499 = vmatpush1.bf16.msra.mxu0 0
  %500 = vmatprep.subr.bf16.mxu0 0
  %501 = vmatpush1.bf16.msra.mxu0 0
  %502 = vmatprep.subr.bf16.mxu0 0
  %503 = vmatpush1.bf16.msra.mxu0 %v39
  %504 = vmatprep.subr.bf16.mxu0 0
  %505 = vmatpush1.bf16.msra.mxu0 %v38
  %506 = vmatprep.subr.bf16.mxu0 0
  %507 = vmatpush2.bf16.msra.mxu0 0
  %508 = vmatprep.subr.bf16.mxu0 0
  %509 = vmatpush2.bf16.msra.mxu0 0
  %510 = vmatprep.subr.bf16.mxu0 0
  %511 = vmatpush2.bf16.msra.mxu0 0
  %512 = vmatprep.subr.bf16.mxu0 0
  %513 = vmatpush2.bf16.msra.mxu0 0
  %514 = vmatprep.subr.bf16.mxu0 0
  %515 = vmatpush2.bf16.msra.mxu0 0
  %516 = vmatprep.subr.bf16.mxu0 0
  %517 = vmatpush2.bf16.msra.mxu0 0
  %518 = vmatprep.subr.bf16.mxu0 0
  %519 = vmatpush2.bf16.msra.mxu0 0
  %520 = vmatprep.subr.bf16.mxu0 0
  %521 = vmatpush2.bf16.msra.mxu0 0
  %522 = vmatprep.mubr.bf16.mxu0 0
  %523 = vmatmul.mubr.bf16.gmra.mxu0 %v488
  %v524 = vpop.f32.mrf.mxu0
  %v525 = vadd.f32 0.0, %v524
  %v526 = vpop.f32.mrf.mxu0
  %v527 = vpop.f32.mrf.mxu0
  %v528 = vpop.f32.mrf.mxu0
  %529 = vdwg.mxu0
  %v530 = vadd.f32 %v485, %v525
  %v531 = vxor.u32 %v530, 2147483648
  %v532 = vmul.f32 %v531, 1.442695
  %v533 = vpow.pop %v532
  %v534 = vadd.f32 %v533, 1.0
  %v535 = vrcp.pop %v534
  %v536 = vmul.f32 1.0, %v535
  %v537 = vtanh.pop %v530
  %539 = vrot.lane.b32.xlu0 %v483, 32
  %v540 = vpop.permute.xlu0 %539
  %v542 = vmul.f32 %v536, %v540
  %544 = vrot.lane.b32.xlu0 %v537, 64
  %v545 = vpop.permute.xlu0 %544
  %v547 = vmul.f32 %v536, %v545
  %549 = vrot.lane.b32.xlu0 %v547, 32
  %v550 = vpop.permute.xlu0 %549
  %v552 = vadd.f32 %v542, %v550
  %v553 = vtanh.pop %v552
  %555 = vrot.lane.b32.xlu0 %v553, 64
  %v556 = vpop.permute.xlu0 %555
  %v558 = vmul.f32 %v536, %v556
  %560 = vrot.lane.b32.xlu0 %v558, 32
  %v561 = vpop.permute.xlu0 %560
  %563 = vst.msk [vmem:[#allocation2] sm:$0xff] %vm42, %v561
  %565 = vrot.lane.b32.xlu0 %v552, 96
  %v566 = vpop.permute.xlu0 %565
  %568 = vst.msk [vmem:[#allocation3] sm:$0xff] %vm42, %v566
  %s569 = scalar_lea.vmem %s2, 40
  %570 = vst.msk [vmem:[%s569] sm:$0xff] %vm42, %v561
  %v571 = vld [vmem:[#allocation2] sm:$0xff]
  %v572 = vld [vmem:[#allocation3] sm:$0xff]
  %s573 = scalar_lea.vmem %s0, 48
  %v574 = vld [vmem:[%s573] sm:$0xff]
  %v575 = vpack.c.bf16 %v571, %v571
  %v577 = vsel %vm42, %v575, 0
  %579 = vmatprep.subr.bf16.mxu0 0
  %580 = vmatpush1.bf16.msra.mxu0 0
  %581 = vmatprep.subr.bf16.mxu0 0
  %582 = vmatpush1.bf16.msra.mxu0 0
  %583 = vmatprep.subr.bf16.mxu0 0
  %584 = vmatpush1.bf16.msra.mxu0 0
  %585 = vmatprep.subr.bf16.mxu0 0
  %586 = vmatpush1.bf16.msra.mxu0 0
  %587 = vmatprep.subr.bf16.mxu0 0
  %588 = vmatpush1.bf16.msra.mxu0 0
  %589 = vmatprep.subr.bf16.mxu0 0
  %590 = vmatpush1.bf16.msra.mxu0 0
  %591 = vmatprep.subr.bf16.mxu0 0
  %592 = vmatpush1.bf16.msra.mxu0 %v39
  %593 = vmatprep.subr.bf16.mxu0 0
  %594 = vmatpush1.bf16.msra.mxu0 %v38
  %595 = vmatprep.subr.bf16.mxu0 0
  %596 = vmatpush2.bf16.msra.mxu0 0
  %597 = vmatprep.subr.bf16.mxu0 0
  %598 = vmatpush2.bf16.msra.mxu0 0
  %599 = vmatprep.subr.bf16.mxu0 0
  %600 = vmatpush2.bf16.msra.mxu0 0
  %601 = vmatprep.subr.bf16.mxu0 0
  %602 = vmatpush2.bf16.msra.mxu0 0
  %603 = vmatprep.subr.bf16.mxu0 0
  %604 = vmatpush2.bf16.msra.mxu0 0
  %605 = vmatprep.subr.bf16.mxu0 0
  %606 = vmatpush2.bf16.msra.mxu0 0
  %607 = vmatprep.subr.bf16.mxu0 0
  %608 = vmatpush2.bf16.msra.mxu0 0
  %609 = vmatprep.subr.bf16.mxu0 0
  %610 = vmatpush2.bf16.msra.mxu0 0
  %611 = vmatprep.mubr.bf16.mxu0 0
  %612 = vmatmul.mubr.bf16.gmra.mxu0 %v577
  %v613 = vpop.f32.mrf.mxu0
  %v614 = vadd.f32 0.0, %v613
  %v615 = vpop.f32.mrf.mxu0
  %v616 = vpop.f32.mrf.mxu0
  %v617 = vpop.f32.mrf.mxu0
  %618 = vdwg.mxu0
  %v619 = vadd.f32 %v574, %v614
  %v620 = vxor.u32 %v619, 2147483648
  %v621 = vmul.f32 %v620, 1.442695
  %v622 = vpow.pop %v621
  %v623 = vadd.f32 %v622, 1.0
  %v624 = vrcp.pop %v623
  %v625 = vmul.f32 1.0, %v624
  %v626 = vtanh.pop %v619
  %628 = vrot.lane.b32.xlu0 %v572, 32
  %v629 = vpop.permute.xlu0 %628
  %v631 = vmul.f32 %v625, %v629
  %633 = vrot.lane.b32.xlu0 %v626, 64
  %v634 = vpop.permute.xlu0 %633
  %v636 = vmul.f32 %v625, %v634
  %638 = vrot.lane.b32.xlu0 %v636, 32
  %v639 = vpop.permute.xlu0 %638
  %v641 = vadd.f32 %v631, %v639
  %v642 = vtanh.pop %v641
  %644 = vrot.lane.b32.xlu0 %v642, 64
  %v645 = vpop.permute.xlu0 %644
  %v647 = vmul.f32 %v625, %v645
  %649 = vrot.lane.b32.xlu0 %v647, 32
  %v650 = vpop.permute.xlu0 %649
  %652 = vst.msk [vmem:[#allocation2] sm:$0xff] %vm42, %v650
  %654 = vrot.lane.b32.xlu0 %v641, 96
  %v655 = vpop.permute.xlu0 %654
  %657 = vst.msk [vmem:[#allocation3] sm:$0xff] %vm42, %v655
  %s658 = scalar_lea.vmem %s2, 48
  %659 = vst.msk [vmem:[%s658] sm:$0xff] %vm42, %v650
  %v660 = vld [vmem:[#allocation2] sm:$0xff]
  %v661 = vld [vmem:[#allocation3] sm:$0xff]
  %s662 = scalar_lea.vmem %s0, 56
  %v663 = vld [vmem:[%s662] sm:$0xff]
  %v664 = vpack.c.bf16 %v660, %v660
  %v666 = vsel %vm42, %v664, 0
  %668 = vmatprep.subr.bf16.mxu0 0
  %669 = vmatpush1.bf16.msra.mxu0 0
  %670 = vmatprep.subr.bf16.mxu0 0
  %671 = vmatpush1.bf16.msra.mxu0 0
  %672 = vmatprep.subr.bf16.mxu0 0
  %673 = vmatpush1.bf16.msra.mxu0 0
  %674 = vmatprep.subr.bf16.mxu0 0
  %675 = vmatpush1.bf16.msra.mxu0 0
  %676 = vmatprep.subr.bf16.mxu0 0
  %677 = vmatpush1.bf16.msra.mxu0 0
  %678 = vmatprep.subr.bf16.mxu0 0
  %679 = vmatpush1.bf16.msra.mxu0 0
  %680 = vmatprep.subr.bf16.mxu0 0
  %681 = vmatpush1.bf16.msra.mxu0 %v39
  %682 = vmatprep.subr.bf16.mxu0 0
  %683 = vmatpush1.bf16.msra.mxu0 %v38
  %684 = vmatprep.subr.bf16.mxu0 0
  %685 = vmatpush2.bf16.msra.mxu0 0
  %686 = vmatprep.subr.bf16.mxu0 0
  %687 = vmatpush2.bf16.msra.mxu0 0
  %688 = vmatprep.subr.bf16.mxu0 0
  %689 = vmatpush2.bf16.msra.mxu0 0
  %690 = vmatprep.subr.bf16.mxu0 0
  %691 = vmatpush2.bf16.msra.mxu0 0
  %692 = vmatprep.subr.bf16.mxu0 0
  %693 = vmatpush2.bf16.msra.mxu0 0
  %694 = vmatprep.subr.bf16.mxu0 0
  %695 = vmatpush2.bf16.msra.mxu0 0
  %696 = vmatprep.subr.bf16.mxu0 0
  %697 = vmatpush2.bf16.msra.mxu0 0
  %698 = vmatprep.subr.bf16.mxu0 0
  %699 = vmatpush2.bf16.msra.mxu0 0
  %700 = vmatprep.mubr.bf16.mxu0 0
  %701 = vmatmul.mubr.bf16.gmra.mxu0 %v666
  %v702 = vpop.f32.mrf.mxu0
  %v703 = vadd.f32 0.0, %v702
  %v704 = vpop.f32.mrf.mxu0
  %v705 = vpop.f32.mrf.mxu0
  %v706 = vpop.f32.mrf.mxu0
  %707 = vdwg.mxu0
  %v708 = vadd.f32 %v663, %v703
  %v709 = vxor.u32 %v708, 2147483648
  %v710 = vmul.f32 %v709, 1.442695
  %v711 = vpow.pop %v710
  %v712 = vadd.f32 %v711, 1.0
  %v713 = vrcp.pop %v712
  %v714 = vmul.f32 1.0, %v713
  %v715 = vtanh.pop %v708
  %717 = vrot.lane.b32.xlu0 %v661, 32
  %v718 = vpop.permute.xlu0 %717
  %v720 = vmul.f32 %v714, %v718
  %722 = vrot.lane.b32.xlu0 %v715, 64
  %v723 = vpop.permute.xlu0 %722
  %v725 = vmul.f32 %v714, %v723
  %727 = vrot.lane.b32.xlu0 %v725, 32
  %v728 = vpop.permute.xlu0 %727
  %v730 = vadd.f32 %v720, %v728
  %v731 = vtanh.pop %v730
  %733 = vrot.lane.b32.xlu0 %v731, 64
  %v734 = vpop.permute.xlu0 %733
  %v736 = vmul.f32 %v714, %v734
  %738 = vrot.lane.b32.xlu0 %v736, 32
  %v739 = vpop.permute.xlu0 %738
  %741 = vst.msk [vmem:[#allocation2] sm:$0xff] %vm42, %v739
  %743 = vrot.lane.b32.xlu0 %v730, 96
  %v744 = vpop.permute.xlu0 %743
  %746 = vst.msk [vmem:[#allocation3] sm:$0xff] %vm42, %v744
  %s747 = scalar_lea.vmem %s2, 56
  %748 = vst.msk [vmem:[%s747] sm:$0xff] %vm42, %v739
  %v749 = vld [vmem:[#allocation2] sm:$0xff]
  %750 = vst.msk [vmem:[%s3] sm:$0xff] %vm42, %v749
  %v751 = vld [vmem:[#allocation3] sm:$0xff]
  %752 = vst.msk [vmem:[%s4] sm:$0xff] %vm42, %v751
  // Predicated region
  $region14: #{encoder_forward.2} parent=0 // pred_check
    _
  $region15: #{encoder_forward.2} parent=0 // pred_check_branch
    %754 = sbr.rel (0) target = $region17
  $region16: #{encoder_forward.2} parent=0 // pred_region
    _
  $region17: #{encoder_forward.2} parent=0 // pred_fallthru
    _
  // Predicated region
  $region18: #{encoder_forward.2} parent=0 // pred_check
    _
  $region19: #{encoder_forward.2} parent=0 // pred_check_branch
    %756 = sbr.rel (0) target = $region21
  $region20: #{encoder_forward.2} parent=0 // pred_region
    _
  $region21: #{encoder_forward.2} parent=0 // pred_fallthru
    _
  // Predicated region
  $region22: #{encoder_forward.2} parent=0 // pred_check
    _
  $region23: #{encoder_forward.2} parent=0 // pred_check_branch
    %758 = sbr.rel (0) target = $region25
  $region24: #{encoder_forward.2} parent=0 // pred_region
    _
  $region25: #{encoder_forward.2} parent=0 // pred_fallthru
    _
  // Predicated region
  $region26: #{encoder_forward.2} parent=0 // pred_check
    _
  $region27: #{encoder_forward.2} parent=0 // pred_check_branch
    %760 = sbr.rel (0) target = $region29
  $region28: #{encoder_forward.2} parent=0 // pred_region
    _
  $region29: #{encoder_forward.2} parent=0 // pred_fallthru
    _
  // Predicated region
  $region30: #{encoder_forward.2} parent=0 // pred_check
    _
  $region31: #{encoder_forward.2} parent=0 // pred_check_branch
    %762 = sbr.rel (0) target = $region33
  $region32: #{encoder_forward.2} parent=0 // pred_region
    _
  $region33: #{encoder_forward.2} parent=0 // pred_fallthru
    _
  // Predicated region
  $region34: #{encoder_forward.2} parent=0 // pred_check
    _
  $region35: #{encoder_forward.2} parent=0 // pred_check_branch
    %764 = sbr.rel (0) target = $region37
  $region36: #{encoder_forward.2} parent=0 // pred_region
    _
  $region37: #{encoder_forward.2} parent=0 // pred_fallthru
    _

</llo_original>
